<compile_context>
chip_gen: v7x
topology: tpu7x:2x2x1
jax: 0.10.0
libtpu: 0.0.40
codegen_flags: <defaults>
</compile_context>

<pallas_src>
import functools

import jax
import jax.numpy as jnp
from jax.experimental import pallas as pl
from jax.experimental.pallas import tpu as pltpu

_LANE = 128
_SUBLANE = 8
_TARGET_BLOCK_BYTES = 8 * 1024 * 1024   # real (lane-padded) bytes per input block


def _round_up(v, n):
    return ((v + n - 1) // n) * n


def _rowsum_kernel(x_ref, o_ref, *, groups, group_width):
    """grid=(M blocks,). x_ref: (tm, groups*group_width); o_ref: lane-dense sums."""
    x = x_ref[...].astype(jnp.float32)                  # f32 accumulation (bf16-safe)
    tm = x_ref.shape[0]
    if groups == 1:
        s = jnp.sum(x, axis=-1)                         # (tm,) lane reduce
    else:
        # Small-K fold: each 128-lane row carries `groups` original rows.
        s = jnp.sum(x.reshape(tm, groups, group_width), axis=-1)   # (tm, groups)
    o_ref[...] = s.reshape(o_ref.shape).astype(o_ref.dtype)


def _rowsum_ktiled_kernel(x_ref, o_ref, acc_ref, *, kk, tk):
    """grid=(M blocks, K blocks). f32 accumulator; init at k==0, write at k==last."""
    j = pl.program_id(1)

    @pl.when(j == 0)
    def _():
        acc_ref[...] = jnp.zeros_like(acc_ref)

    x = x_ref[...].astype(jnp.float32)                  # (tm, tk)
    if kk % tk != 0:
        # Mask the ragged K tail of the last block (OOB lanes are unspecified).
        lane = jax.lax.broadcasted_iota(jnp.int32, x.shape, 1)
        x = jnp.where(j * tk + lane < kk, x, 0.0)
    acc_ref[...] += jnp.sum(x, axis=-1)[None, :]

    @pl.when(j == pl.num_programs(1) - 1)
    def _():
        o_ref[...] = acc_ref[...].reshape(o_ref.shape).astype(o_ref.dtype)


def summation(x, inputwidth):
    """Pallas implementation of the Summation module forward pass."""
    shape = x.shape
    assert shape[-1] == inputwidth, "last axis must equal inputwidth"
    x2d = x.reshape(-1, inputwidth)                     # free row-major view
    m, k = x2d.shape
    itemsize = x2d.dtype.itemsize

    # Small-K lane folding (free contiguous reshape).
    groups = 1
    if k < _LANE and _LANE % k == 0 and m % (_LANE // k) == 0:
        groups = _LANE // k
    mm = m // groups
    kk = k * groups
    if groups > 1:
        x2d = x2d.reshape(mm, kk)

    # Real (lane-padded) VMEM bytes per row of a block.
    row_bytes = _round_up(kk, _LANE) * itemsize
    rows_for_budget = max(1, _TARGET_BLOCK_BYTES // row_bytes)

    cost = pl.CostEstimate(
        flops=m * k, transcendentals=0,
        bytes_accessed=m * k * itemsize + m * itemsize)

    if rows_for_budget >= 128 or rows_for_budget >= mm:
        # --- M-tiled streaming path (common case) ------------------------------
        total_bytes = mm * row_bytes
        if mm <= 128 or total_bytes <= _TARGET_BLOCK_BYTES // 4:
            tm = mm                                     # single full block
        else:
            tm = min(rows_for_budget, (mm + 1) // 2)    # keep >= 2 blocks
            tm = max(128, (tm // 128) * 128)            # 128-aligned rows
        num_blocks = pl.cdiv(mm, tm)
        tm_out = tm * groups                            # original rows per block
        if tm_out % _LANE == 0:
            out_rows, out_cols = tm_out // _LANE, _LANE
        else:                                           # only when num_blocks == 1
            out_rows, out_cols = 1, tm_out

        in_block_bytes = _round_up(tm, _SUBLANE) * row_bytes
        out_block_bytes = (_round_up(out_rows, _SUBLANE)
                           * _round_up(out_cols, _LANE) * itemsize)
        vmem_limit = int(min(max(2 * in_block_bytes + 2 * out_block_bytes
                                 + (4 << 20), 16 << 20), 48 << 20))

        kernel = functools.partial(_rowsum_kernel, groups=groups, group_width=k)
        out3d = pl.pallas_call(
            kernel,
            out_shape=jax.ShapeDtypeStruct((num_blocks, out_rows, out_cols), x.dtype),
            grid_spec=pltpu.PrefetchScalarGridSpec(
                num_scalar_prefetch=0,
                grid=(num_blocks,),
                in_specs=[pl.BlockSpec((tm, kk), lambda i: (i, 0))],
                out_specs=pl.BlockSpec((1, out_rows, out_cols), lambda i: (i, 0, 0)),
            ),
            compiler_params=pltpu.CompilerParams(
                dimension_semantics=("parallel",),
                vmem_limit_bytes=vmem_limit,
            ),
            cost_estimate=cost,
        )(x2d)
    else:
        # --- K-tiled fallback for very wide rows --------------------------------
        tm = mm if mm <= 256 else 256
        tk = max(_LANE, (_TARGET_BLOCK_BYTES // (tm * itemsize)) // _LANE * _LANE)
        tk = min(tk, _round_up(kk, _LANE))
        num_m = pl.cdiv(mm, tm)
        num_k = pl.cdiv(kk, tk)
        in_block_bytes = _round_up(tm, _SUBLANE) * tk * itemsize
        vmem_limit = int(min(max(2 * in_block_bytes + (6 << 20), 16 << 20), 48 << 20))

        kernel = functools.partial(_rowsum_ktiled_kernel, kk=kk, tk=tk)
        out3d = pl.pallas_call(
            kernel,
            out_shape=jax.ShapeDtypeStruct((num_m, 1, tm), x.dtype),
            grid_spec=pltpu.PrefetchScalarGridSpec(
                num_scalar_prefetch=0,
                grid=(num_m, num_k),
                in_specs=[pl.BlockSpec((tm, tk), lambda i, j: (i, j))],
                out_specs=pl.BlockSpec((1, 1, tm), lambda i, j: (i, 0, 0)),
                scratch_shapes=[pltpu.VMEM((1, tm), jnp.float32)],
            ),
            compiler_params=pltpu.CompilerParams(
                dimension_semantics=("parallel", "arbitrary"),
                vmem_limit_bytes=vmem_limit,
            ),
            cost_estimate=cost,
        )(x2d)

    # Drop garbage sums from the ragged last block, restore (..., 1) shape.
    out = out3d.reshape(-1)[:m]
    return out.reshape(shape[:-1] + (1,))


if __name__ == "__main__":
    inputwidth = 32
    key = jax.random.PRNGKey(0)
    k1, k2, k3 = jax.random.split(key, 3)

    # 1) Small shape consistent with the module: (..., inputwidth).
    x = jax.random.normal(k1, (2, 4, 8, inputwidth), dtype=jnp.float32)
    out = summation(x, inputwidth)
    jax.block_until_ready(out)
    ref = jnp.sum(x, axis=-1, keepdims=True)
    assert out.shape == (2, 4, 8, 1)
    assert jnp.allclose(out, ref, atol=1e-4, rtol=1e-4)

    # 2) Multi-block folded path with a ragged last block.
    x_big = jax.random.normal(k2, (40000, inputwidth), dtype=jnp.float32)
    out_big = summation(x_big, inputwidth)
    jax.block_until_ready(out_big)
    ref_big = jnp.sum(x_big, axis=-1, keepdims=True)
    assert out_big.shape == (40000, 1)
    assert jnp.allclose(out_big, ref_big, atol=1e-3, rtol=1e-4)

    # 3) Very wide rows: exercises the K-tiled accumulator path (ragged K tail).
    wide_k = 18000
    x_wide = jax.random.normal(k3, (160, wide_k), dtype=jnp.float32)
    out_wide = summation(x_wide, wide_k)
    jax.block_until_ready(out_wide)
    ref_wide = jnp.sum(x_wide, axis=-1, keepdims=True)
    assert out_wide.shape == (160, 1)
    assert jnp.allclose(out_wide, ref_wide, atol=1e-2, rtol=1e-4)

    print("KERNEL_OK")
</pallas_src>

<mosaic_0001>
module attributes {stable_mosaic.version = 11 : i64} {
  func.func @_rowsum_kernel(%arg0: i32, %arg1: memref<16x128xf32, #tpu.memory_space<vmem>>, %arg2: memref<1x1x64xf32, #tpu.memory_space<vmem>>) attributes {dimension_semantics = [#tpu.dimension_semantics<parallel>], iteration_bounds = array<i64: 1>, scalar_prefetch = 0 : i64, scratch_operands = 0 : i64, tpu.core_type = #tpu.core_type<tc>, window_params = [{transform_indices = @transform_0, window_bounds = array<i64: 16, 128>}, {transform_indices = @transform_1, window_bounds = array<i64: 1, 1, 64>}]} {
    %c0 = arith.constant 0 : index
    %c0_0 = arith.constant 0 : index
    %0 = vector.load %arg1[%c0, %c0_0] : memref<16x128xf32, #tpu.memory_space<vmem>>, vector<16x128xf32>
    %1 = vector.shape_cast %0 : vector<16x128xf32> to vector<16x4x32xf32>
    %cst = arith.constant dense<0.000000e+00> : vector<16x4xf32>
    %2 = vector.multi_reduction <add>, %1, %cst [2] : vector<16x4x32xf32> to vector<16x4xf32>
    %3 = vector.shape_cast %2 : vector<16x4xf32> to vector<1x1x64xf32>
    %c0_1 = arith.constant 0 : index
    %c0_2 = arith.constant 0 : index
    %c0_3 = arith.constant 0 : index
    %4 = vector.load %arg2[%c0_1, %c0_2, %c0_3] : memref<1x1x64xf32, #tpu.memory_space<vmem>>, vector<1x1x64xf32>
    tpu.vector_store %arg2[%c0_1, %c0_2, %c0_3], %3 {strides = array<i32>} : memref<1x1x64xf32, #tpu.memory_space<vmem>>, vector<1x1x64xf32>,
    return
  }
  func.func @transform_0(%arg0: i32) -> (i32, i32) {
    %c0_i32 = arith.constant 0 : i32
    %c0_i32_0 = arith.constant 0 : i32
    return %arg0, %c0_i32 : i32, i32
  }
  func.func @transform_1(%arg0: i32) -> (i32, i32, i32) {
    %c0_i32 = arith.constant 0 : i32
    %c0_i32_0 = arith.constant 0 : i32
    %c0_i32_1 = arith.constant 0 : i32
    return %arg0, %c0_i32, %c0_i32_0 : i32, i32, i32
  }
}

</mosaic_0001>

<llo_original>
// kernel: tpu_custom_call.1
$region0: #{tpu_custom_call.1}
  #allocation0 [shape = 'u32[]', space=smem, size = 0x4, offset = 0x4, fixed_abs, tag = 'smem constant byte address 0x4 - core index']
  #allocation1 [shape = 'u32[144,128]{1,0:T(1,128)}', space=vmem, size = 0x12000, scoped, tag = 'internal scratch']
  %s0 = inlined_call_operand.hbm [shape: f32[16,128], index: 0, kind: input, shape index: {}]
  %s1 = inlined_call_operand.hbm [shape: f32[1,1,64], index: 1, kind: output, shape index: {}]
  %s2 = sld [smem:[#allocation0]]
  $region18: #{tpu_custom_call.1} parent=0
    _
  %s4 = ssub.s32 1, %s2
  %s5 = scalar_select 0, %s4, %s2
  $region1: #{tpu_custom_call.1} parent=0
    #allocation2 [shape = 'u8[8192]{0}', space=vmem, size = 0x2000, scoped, tag = 'input window, operand 0, single buffered']
    #allocation3 [shape = 's32[1]{0}', space=sflag, size = 0x4, scoped, tag = 'scoped memory for tpu_custom_call.1']
    #allocation4 [shape = 's32[1]{0}', space=sflag, size = 0x4, scoped, tag = 'scoped memory for tpu_custom_call.1']
    #allocation5 [shape = 'u8[512]{0}', space=vmem, size = 0x400, scoped, tag = 'output window, operand 0, single buffered']
    %6 = vsyncpa [#allocation3], 0
    %7 = vsyncpa [#allocation4], 0
    // Predicated region
    $region2: #{tpu_custom_call.1} parent=1 // pred_check
      _
    $region3: #{tpu_custom_call.1} parent=1 // pred_check_branch
      %9 = sbr.rel (0) target = $region5
    $region4: #{tpu_custom_call.1} parent=1 // pred_region
      %s11 = ssub.s32 256, 256
      %12 = vsyncadd [#allocation3], %s11
      %s13 = sshll.u32 [#allocation2], 4
      %s14 = int_to_ptr.vmem [resolvable:$true] %s13
      %19 = dma.hbm_to_vmem [thread:$0]  %s0, 256, %s14, [#allocation3], 128, 128, 8
    $region5: #{tpu_custom_call.1} parent=1 // pred_fallthru
      _
    // Predicated region
    $region6: #{tpu_custom_call.1} parent=1 // pred_check
      _
    $region7: #{tpu_custom_call.1} parent=1 // pred_check_branch
      %21 = sbr.rel (0) target = $region9
    $region8: #{tpu_custom_call.1} parent=1 // pred_region
      %22 = dma.done [#allocation3], 256
    $region9: #{tpu_custom_call.1} parent=1 // pred_fallthru
      _
    %v23 = vld [vmem:[#allocation2] sm:$0xff]
    %v24 = vld [vmem:[#allocation2 + $0x8] sm:$0xff]
    %27 = vrot.lane.b32.xlu0 %v23, 96
    %v28 = vpop.permute.xlu0 %27
    %29 = vrot.lane.b32.xlu0 %v24, 96
    %v30 = vpop.permute.xlu0 %29
    %33 = vrot.lane.b32.xlu0 %v23, 64
    %v34 = vpop.permute.xlu0 %33
    %35 = vrot.lane.b32.xlu0 %v24, 64
    %v36 = vpop.permute.xlu0 %35
    %39 = vrot.lane.b32.xlu0 %v23, 32
    %v40 = vpop.permute.xlu0 %39
    %41 = vrot.lane.b32.xlu0 %v24, 32
    %v42 = vpop.permute.xlu0 %41
    %v45 = vcombine.low %v23, %v34
    %v46 = vcombine.high %v23, %v34
    %v48 = vunpack.c.l.s4 1983009808
    %v49 = vunpack.c.0.s8 %v48
    %v50 = vlaneseq
    %v51 = vshrl.u32 %v50, 7
    %v52 = vsub.s32 %v49, %v51
    %v53 = vrot.slane %v45, %v52
    %v55 = vunpack.c.l.s4 1983009808
    %v56 = vunpack.c.0.s8 %v55
    %v57 = vlaneseq
    %v58 = vshrl.u32 %v57, 7
    %v59 = vsub.s32 %v56, %v58
    %v60 = vrot.slane %v46, %v59
    %v61 = vcombine.low %v28, %v40
    %v62 = vcombine.high %v28, %v40
    %v64 = vunpack.c.l.s4 1983009808
    %v65 = vunpack.c.0.s8 %v64
    %v66 = vlaneseq
    %v67 = vshrl.u32 %v66, 7
    %v68 = vsub.s32 %v65, %v67
    %v69 = vrot.slane %v61, %v68
    %v71 = vunpack.c.l.s4 1983009808
    %v72 = vunpack.c.0.s8 %v71
    %v73 = vlaneseq
    %v74 = vshrl.u32 %v73, 7
    %v75 = vsub.s32 %v72, %v74
    %v76 = vrot.slane %v62, %v75
    %v77 = vcombine.low %v53, %v69
    %v78 = vcombine.high %v53, %v69
    %v80 = vunpack.c.l.s4 1934713408
    %v81 = vunpack.c.0.s8 %v80
    %v82 = vlaneseq
    %v83 = vshrl.u32 %v82, 7
    %v84 = vsub.s32 %v81, %v83
    %v85 = vrot.slane %v77, %v84
    %v87 = vunpack.c.l.s4 1934713408
    %v88 = vunpack.c.0.s8 %v87
    %v89 = vlaneseq
    %v90 = vshrl.u32 %v89, 7
    %v91 = vsub.s32 %v88, %v90
    %v92 = vrot.slane %v78, %v91
    %v93 = vcombine.low %v60, %v76
    %v94 = vcombine.high %v60, %v76
    %v96 = vunpack.c.l.s4 1934713408
    %v97 = vunpack.c.0.s8 %v96
    %v98 = vlaneseq
    %v99 = vshrl.u32 %v98, 7
    %v100 = vsub.s32 %v97, %v99
    %v101 = vrot.slane %v93, %v100
    %v103 = vunpack.c.l.s4 1934713408
    %v104 = vunpack.c.0.s8 %v103
    %v105 = vlaneseq
    %v106 = vshrl.u32 %v105, 7
    %v107 = vsub.s32 %v104, %v106
    %v108 = vrot.slane %v94, %v107
    %v109 = vcombine.high %v85, 0.0
    %v110 = vcombine.high %v92, 0.0
    %v111 = vcombine.high %v101, 0.0
    %v112 = vcombine.high %v108, 0.0
    %v113 = vcombine.low %v24, %v36
    %v114 = vcombine.high %v24, %v36
    %v116 = vunpack.c.l.s4 1983009808
    %v117 = vunpack.c.0.s8 %v116
    %v118 = vlaneseq
    %v119 = vshrl.u32 %v118, 7
    %v120 = vsub.s32 %v117, %v119
    %v121 = vrot.slane %v113, %v120
    %v123 = vunpack.c.l.s4 1983009808
    %v124 = vunpack.c.0.s8 %v123
    %v125 = vlaneseq
    %v126 = vshrl.u32 %v125, 7
    %v127 = vsub.s32 %v124, %v126
    %v128 = vrot.slane %v114, %v127
    %v129 = vcombine.low %v30, %v42
    %v130 = vcombine.high %v30, %v42
    %v132 = vunpack.c.l.s4 1983009808
    %v133 = vunpack.c.0.s8 %v132
    %v134 = vlaneseq
    %v135 = vshrl.u32 %v134, 7
    %v136 = vsub.s32 %v133, %v135
    %v137 = vrot.slane %v129, %v136
    %v139 = vunpack.c.l.s4 1983009808
    %v140 = vunpack.c.0.s8 %v139
    %v141 = vlaneseq
    %v142 = vshrl.u32 %v141, 7
    %v143 = vsub.s32 %v140, %v142
    %v144 = vrot.slane %v130, %v143
    %v145 = vcombine.low %v121, %v137
    %v146 = vcombine.high %v121, %v137
    %v148 = vunpack.c.l.s4 1934713408
    %v149 = vunpack.c.0.s8 %v148
    %v150 = vlaneseq
    %v151 = vshrl.u32 %v150, 7
    %v152 = vsub.s32 %v149, %v151
    %v153 = vrot.slane %v145, %v152
    %v155 = vunpack.c.l.s4 1934713408
    %v156 = vunpack.c.0.s8 %v155
    %v157 = vlaneseq
    %v158 = vshrl.u32 %v157, 7
    %v159 = vsub.s32 %v156, %v158
    %v160 = vrot.slane %v146, %v159
    %v161 = vcombine.low %v128, %v144
    %v162 = vcombine.high %v128, %v144
    %v164 = vunpack.c.l.s4 1934713408
    %v165 = vunpack.c.0.s8 %v164
    %v166 = vlaneseq
    %v167 = vshrl.u32 %v166, 7
    %v168 = vsub.s32 %v165, %v167
    %v169 = vrot.slane %v161, %v168
    %v171 = vunpack.c.l.s4 1934713408
    %v172 = vunpack.c.0.s8 %v171
    %v173 = vlaneseq
    %v174 = vshrl.u32 %v173, 7
    %v175 = vsub.s32 %v172, %v174
    %v176 = vrot.slane %v162, %v175
    %v177 = vcombine.high %v153, 0.0
    %v178 = vcombine.high %v160, 0.0
    %v179 = vcombine.high %v169, 0.0
    %v180 = vcombine.high %v176, 0.0
    %vm181 = vcmask 257024
    %v182 = vsel %vm181, %v85, 0.0
    %183 = vadd.xlane.f32.xlu0 %v182
    %v184 = vpop.xlane.xlu0 %183
    %v185 = vsel %vm181, %v109, 0.0
    %186 = vadd.xlane.f32.xlu0 %v185
    %v187 = vpop.xlane.xlu0 %186
    %v188 = vsel %vm181, %v92, 0.0
    %189 = vadd.xlane.f32.xlu0 %v188
    %v190 = vpop.xlane.xlu0 %189
    %v191 = vsel %vm181, %v110, 0.0
    %192 = vadd.xlane.f32.xlu0 %v191
    %v193 = vpop.xlane.xlu0 %192
    %v194 = vsel %vm181, %v101, 0.0
    %195 = vadd.xlane.f32.xlu0 %v194
    %v196 = vpop.xlane.xlu0 %195
    %v197 = vsel %vm181, %v111, 0.0
    %198 = vadd.xlane.f32.xlu0 %v197
    %v199 = vpop.xlane.xlu0 %198
    %v200 = vsel %vm181, %v108, 0.0
    %201 = vadd.xlane.f32.xlu0 %v200
    %v202 = vpop.xlane.xlu0 %201
    %v203 = vsel %vm181, %v112, 0.0
    %204 = vadd.xlane.f32.xlu0 %v203
    %v205 = vpop.xlane.xlu0 %204
    %v206 = vsel %vm181, %v153, 0.0
    %207 = vadd.xlane.f32.xlu0 %v206
    %v208 = vpop.xlane.xlu0 %207
    %v209 = vsel %vm181, %v177, 0.0
    %210 = vadd.xlane.f32.xlu0 %v209
    %v211 = vpop.xlane.xlu0 %210
    %v212 = vsel %vm181, %v160, 0.0
    %213 = vadd.xlane.f32.xlu0 %v212
    %v214 = vpop.xlane.xlu0 %213
    %v215 = vsel %vm181, %v178, 0.0
    %216 = vadd.xlane.f32.xlu0 %v215
    %v217 = vpop.xlane.xlu0 %216
    %v218 = vsel %vm181, %v169, 0.0
    %219 = vadd.xlane.f32.xlu0 %v218
    %v220 = vpop.xlane.xlu0 %219
    %v221 = vsel %vm181, %v179, 0.0
    %222 = vadd.xlane.f32.xlu0 %v221
    %v223 = vpop.xlane.xlu0 %222
    %v224 = vsel %vm181, %v176, 0.0
    %225 = vadd.xlane.f32.xlu0 %v224
    %v226 = vpop.xlane.xlu0 %225
    %v227 = vsel %vm181, %v180, 0.0
    %228 = vadd.xlane.f32.xlu0 %v227
    %v229 = vpop.xlane.xlu0 %228
    %v246 = vcombine.low %v184, %v187
    %v247 = vcombine.low %v190, %v193
    %v248 = vcombine.low %v196, %v199
    %v249 = vcombine.low %v202, %v205
    %v250 = vcombine.low %v208, %v211
    %v251 = vcombine.low %v214, %v217
    %v252 = vcombine.low %v220, %v223
    %v253 = vcombine.low %v226, %v229
    %254 = vset.pattern.permute.xlu0 0
    %255 = vperm.xlu0 %254, %v246
    %v256 = vpop.permute.xlu0 %255
    %257 = vset.pattern.permute.xlu0 0
    %258 = vperm.xlu0 %257, %v247
    %v259 = vpop.permute.xlu0 %258
    %260 = vset.pattern.permute.xlu0 0
    %261 = vperm.xlu0 %260, %v248
    %v262 = vpop.permute.xlu0 %261
    %263 = vset.pattern.permute.xlu0 0
    %264 = vperm.xlu0 %263, %v249
    %v265 = vpop.permute.xlu0 %264
    %266 = vset.pattern.permute.xlu0 0
    %267 = vperm.xlu0 %266, %v250
    %v268 = vpop.permute.xlu0 %267
    %269 = vset.pattern.permute.xlu0 0
    %270 = vperm.xlu0 %269, %v251
    %v271 = vpop.permute.xlu0 %270
    %272 = vset.pattern.permute.xlu0 0
    %273 = vperm.xlu0 %272, %v252
    %v274 = vpop.permute.xlu0 %273
    %275 = vset.pattern.permute.xlu0 0
    %276 = vperm.xlu0 %275, %v253
    %v277 = vpop.permute.xlu0 %276
    %v278 = vlaneseq
    %v279 = vand.u32 %v278, 127
    %v280 = vlaneseq
    %v281 = vshrl.u32 %v280, 7
    %v282 = vsub.s32 %v279, %v281
    %v283 = vrot.slane %v256, %v282
    %v284 = vadd.s32 %v279, 4294967288
    %v285 = vlaneseq
    %v286 = vshrl.u32 %v285, 7
    %v287 = vsub.s32 %v284, %v286
    %v288 = vrot.slane %v259, %v287
    %vm289 = vcmask 130112
    %v290 = vsel %vm289, %v288, %v283
    %v291 = vadd.s32 %v279, 4294967280
    %v292 = vlaneseq
    %v293 = vshrl.u32 %v292, 7
    %v294 = vsub.s32 %v291, %v293
    %v295 = vrot.slane %v262, %v294
    %vm296 = vcmask 195712
    %v297 = vsel %vm296, %v295, %v290
    %v298 = vadd.s32 %v279, 4294967272
    %v299 = vlaneseq
    %v300 = vshrl.u32 %v299, 7
    %v301 = vsub.s32 %v298, %v300
    %v302 = vrot.slane %v265, %v301
    %vm303 = vcmask 261312
    %v304 = vsel %vm303, %v302, %v297
    %v305 = vadd.s32 %v279, 4294967264
    %v306 = vlaneseq
    %v307 = vshrl.u32 %v306, 7
    %v308 = vsub.s32 %v305, %v307
    %v309 = vrot.slane %v268, %v308
    %vm310 = vcmask 326912
    %v311 = vsel %vm310, %v309, %v304
    %v312 = vadd.s32 %v279, 4294967256
    %v313 = vlaneseq
    %v314 = vshrl.u32 %v313, 7
    %v315 = vsub.s32 %v312, %v314
    %v316 = vrot.slane %v271, %v315
    %vm317 = vcmask 392512
    %v318 = vsel %vm317, %v316, %v311
    %v319 = vadd.s32 %v279, 4294967248
    %v320 = vlaneseq
    %v321 = vshrl.u32 %v320, 7
    %v322 = vsub.s32 %v319, %v321
    %v323 = vrot.slane %v274, %v322
    %vm324 = vcmask 458112
    %v325 = vsel %vm324, %v323, %v318
    %v326 = vadd.s32 %v279, 4294967240
    %v327 = vlaneseq
    %v328 = vshrl.u32 %v327, 7
    %v329 = vsub.s32 %v326, %v328
    %v330 = vrot.slane %v277, %v329
    %vm331 = vcmask 523712
    %v332 = vsel %vm331, %v330, %v325
    %vm334 = vcmask 516096
    %335 = vst.msk [vmem:[#allocation5] sm:$0x1] %vm334, %v332
    // Predicated region
    $region10: #{tpu_custom_call.1} parent=1 // pred_check
      _
    $region11: #{tpu_custom_call.1} parent=1 // pred_check_branch
      %337 = sbr.rel (0) target = $region13
    $region12: #{tpu_custom_call.1} parent=1 // pred_region
      %s339 = ssub.s32 16, 16
      %340 = vsyncadd [#allocation4], %s339
      %s342 = sshll.u32 [#allocation5], 4
      %s343 = int_to_ptr.vmem [resolvable:$true] %s342
      %345 = dma.vmem_to_hbm [thread:$0]  %s343, 16, %s1, [#allocation4]
    $region13: #{tpu_custom_call.1} parent=1 // pred_fallthru
      _
    // Predicated region
    $region14: #{tpu_custom_call.1} parent=1 // pred_check
      _
    $region15: #{tpu_custom_call.1} parent=1 // pred_check_branch
      %347 = sbr.rel (0) target = $region17
    $region16: #{tpu_custom_call.1} parent=1 // pred_region
      %348 = dma.done [#allocation4], 16
    $region17: #{tpu_custom_call.1} parent=1 // pred_fallthru
      _
    %349 = vsyncpa [#allocation3], 1
    %350 = vsyncpa [#allocation4], 1

</llo_original>
